<compile_context>
chip_gen: v7x
topology: tpu7x:2x2x1
jax: 0.10.0
libtpu: 0.0.40
codegen_flags: <defaults>
</compile_context>

<pallas_src>
import functools

import jax
import jax.numpy as jnp
from jax.experimental import pallas as pl
from jax.experimental.pallas import tpu as pltpu


def _attention_pooling_kernel(x_ref, q_ref, o_ref, scores_ref, acc_ref, *,
                              s_chunk):
    # x_ref: (TB, S, E) batch tile; q_ref: (1, E); o_ref: (TB, E)
    # scores_ref: (TB, S) f32 scratch; acc_ref: (TB, E) f32 scratch.
    tb, seq, _ = x_ref.shape
    n_chunks = -(-seq // s_chunk)

    q = q_ref[...]                                        # (1, E)

    # ---- Pass 1: attention scores, chunked along S (sublane axis of x) ----
    # scores[b, s] = <x[b, s, :], q>  (VPU multiply + XLU lane reduce).
    # Chunking keeps the (TB, cs, E) product chunk-sized, never x-tile-sized.
    for c in range(n_chunks):
        lo = c * s_chunk
        hi = min(seq, lo + s_chunk)
        xc = x_ref[:, lo:hi, :]                           # (TB, cs, E)
        scores_ref[:, lo:hi] = jnp.sum(xc * q, axis=-1)   # (TB, cs)

    # ---- Numerically stable softmax over S (== PyTorch dim=1) -------------
    # Lane-dense: (TB, S) with S on the 128-lane axis.
    scores = scores_ref[...]                              # (TB, S)
    m = jnp.max(scores, axis=-1, keepdims=True)           # (TB, 1)
    e = jnp.exp(scores - m)                               # (TB, S)  (EUP)
    denom = jnp.sum(e, axis=-1, keepdims=True)            # (TB, 1)
    scores_ref[...] = e                                   # reuse scratch: exp weights

    # ---- Pass 2: unnormalized weighted sum over S, chunked accumulation ---
    acc_ref[...] = jnp.zeros_like(acc_ref)
    for c in range(n_chunks):
        lo = c * s_chunk
        hi = min(seq, lo + s_chunk)
        xc = x_ref[:, lo:hi, :]                           # (TB, cs, E)
        ec = scores_ref[:, lo:hi]                         # (TB, cs)
        acc_ref[...] += jnp.sum(ec[:, :, None] * xc, axis=1)   # (TB, E)

    # ---- Epilogue: fold softmax normalization into one (TB, E) scale ------
    inv = pl.reciprocal(denom, approx=False)              # (TB, 1)
    o_ref[...] = (acc_ref[...] * inv).astype(o_ref.dtype)


def _choose_s_chunk(seq, max_chunks=8):
    # Chunk the sequence axis so per-chunk temporaries stay small while the
    # Python-unrolled loop stays short (<= max_chunks iterations).
    cs = -(-seq // max_chunks)        # ceil
    cs = -(-cs // 8) * 8              # round up to a sublane multiple
    return min(seq, cs)


def _choose_block_b(batch, row_bytes, tile_target_bytes, min_steps=4):
    # Bytes-driven candidate (multiple of 8 for the (8, 128) output tiling rule).
    tb = max(8, (tile_target_bytes // max(1, row_bytes)) // 8 * 8)
    # Keep the grid at >= min_steps (fallback >= 2) steps whenever the batch
    # can be split into multiple-of-8 blocks: overlaps DMA with compute and
    # lets the "parallel" axis shard across v7x's two TensorCores.
    for steps in (min_steps, 2):
        cap = (batch // steps) // 8 * 8
        if cap >= 8:
            tb = min(tb, cap)
            break
    if tb >= batch:
        return batch                  # tiny batch: single whole-batch block
    return tb


def attention_pooling(x, query, *, block_b=None, interpret=False):
    """x: (B, S, E), query: (E, 1) -> (B, E). Matches the PyTorch forward."""
    B, S, E = x.shape
    itemsize = jnp.dtype(x.dtype).itemsize

    # Lane/sublane-padded VMEM footprint of one batch row of x: the last two
    # dims (S, E) map to (8 sublanes, 128 lanes).
    s_pad = -(-S // 8) * 8
    e_pad = -(-E // 128) * 128
    row_bytes = s_pad * e_pad * itemsize

    # Generation-aware VMEM budget: v7x has 64 MiB per TensorCore, v5e/v6e
    # have 128 MiB.  Leave ~8 MiB headroom for Mosaic internals.
    try:
        vmem_phys = int(pltpu.get_tpu_info().vmem_capacity_bytes)
    except Exception:
        vmem_phys = 64 << 20          # conservative: assume v7x-sized VMEM
    vmem_cap = max(min(vmem_phys - (8 << 20), 96 << 20), 24 << 20)

    # Per-step x-tile target: ~8 MiB is >= ~2.5 us of HBM time even on v7x,
    # so the fixed per-step overhead is <15%; capped so double-buffering plus
    # scratch stays inside the VMEM budget.
    tile_target = min(8 << 20, vmem_cap // 3)

    if block_b is None:
        block_b = _choose_block_b(B, row_bytes, tile_target)
    block_b = max(1, min(block_b, B))

    grid_b = pl.cdiv(B, block_b)
    s_chunk = _choose_s_chunk(S)

    # VMEM accounting with padded shapes: double-buffered x tile, double-
    # buffered output, scores / accumulator scratch, chunk temporaries.
    bb_pad = -(-block_b // 8) * 8
    cs_pad = -(-s_chunk // 8) * 8
    x_tile_bytes = block_b * row_bytes
    scores_bytes = bb_pad * (-(-S // 128) * 128) * 4
    acc_bytes = bb_pad * e_pad * 4
    out_bytes = bb_pad * e_pad * itemsize
    chunk_bytes = block_b * cs_pad * e_pad * 4
    vmem_need = (2 * x_tile_bytes + 2 * out_bytes + scores_bytes + acc_bytes
                 + 3 * chunk_bytes + (4 << 20))
    vmem_limit = int(min(max(vmem_need, 16 << 20), vmem_cap))

    # Present the query as a lane-dense (1, E) row; its block index never
    # changes so Pallas fetches it once.
    q_row = query.reshape(1, E).astype(x.dtype)

    kernel = functools.partial(_attention_pooling_kernel, s_chunk=s_chunk)

    return pl.pallas_call(
        kernel,
        out_shape=jax.ShapeDtypeStruct((B, E), x.dtype),
        grid_spec=pltpu.PrefetchScalarGridSpec(
            num_scalar_prefetch=0,
            grid=(grid_b,),
            in_specs=[
                pl.BlockSpec((block_b, S, E), lambda b: (b, 0, 0)),
                pl.BlockSpec((1, E), lambda b: (0, 0)),
            ],
            out_specs=pl.BlockSpec((block_b, E), lambda b: (b, 0)),
            scratch_shapes=[
                pltpu.VMEM((block_b, S), jnp.float32),   # scores / exp weights
                pltpu.VMEM((block_b, E), jnp.float32),   # context accumulator
            ],
        ),
        compiler_params=pltpu.CompilerParams(
            dimension_semantics=("parallel",),
            vmem_limit_bytes=vmem_limit,
        ),
        interpret=interpret,
    )(x, q_row)


def attention_pooling_ref(x, query):
    # Pure-JAX reference mirroring the PyTorch forward exactly.
    scores = jnp.einsum("bse,eo->bs", x, query)        # (B, S)
    attn = jax.nn.softmax(scores, axis=1)              # (B, S)
    context = jnp.einsum("bse,bs->be", x, attn)        # (B, E)
    return context


if __name__ == "__main__":
    key = jax.random.PRNGKey(0)
    k_x, k_q = jax.random.split(key)

    B, S, E = 2, 8, 32  # batch, seq, embed_dim
    x = jax.random.normal(k_x, (B, S, E), dtype=jnp.float32)
    # deterministic "torch.randn(embed_dim, 1)" equivalent
    query = jax.random.normal(k_q, (E, 1), dtype=jnp.float32)

    out = jax.block_until_ready(attention_pooling(x, query))
    ref = attention_pooling_ref(x, query)

    assert out.shape == (B, E)
    max_err = jnp.max(jnp.abs(out - ref))
    assert jnp.allclose(out, ref, atol=1e-4, rtol=1e-4), f"max abs err {max_err}"
    print("KERNEL_OK")
</pallas_src>

<mosaic_0001>
module attributes {stable_mosaic.version = 11 : i64} {
  func.func @_attention_pooling_kernel(%arg0: i32, %arg1: memref<2x8x32xf32, #tpu.memory_space<vmem>>, %arg2: memref<1x32xf32, #tpu.memory_space<vmem>>, %arg3: memref<2x32xf32, #tpu.memory_space<vmem>>, %arg4: memref<2x8xf32, #tpu.memory_space<vmem>>, %arg5: memref<2x32xf32, #tpu.memory_space<vmem>>) attributes {dimension_semantics = [#tpu.dimension_semantics<parallel>], iteration_bounds = array<i64: 1>, scalar_prefetch = 0 : i64, scratch_operands = 2 : i64, tpu.core_type = #tpu.core_type<tc>, window_params = [{transform_indices = @transform_0, window_bounds = array<i64: 2, 8, 32>}, {pipeline_mode = #tpu.pipeline_mode<synchronous>, transform_indices = @transform_1, window_bounds = array<i64: 1, 32>}, {transform_indices = @transform_2, window_bounds = array<i64: 2, 32>}]} {
    %c0 = arith.constant 0 : index
    %c0_0 = arith.constant 0 : index
    %0 = vector.load %arg2[%c0, %c0_0] : memref<1x32xf32, #tpu.memory_space<vmem>>, vector<1x32xf32>
    %c0_1 = arith.constant 0 : index
    %c0_2 = arith.constant 0 : index
    %c0_3 = arith.constant 0 : index
    %1 = vector.load %arg1[%c0_1, %c0_2, %c0_3] : memref<2x8x32xf32, #tpu.memory_space<vmem>>, vector<2x8x32xf32>
    %2 = vector.shape_cast %0 : vector<1x32xf32> to vector<1x1x32xf32>
    %3 = vector.broadcast %2 : vector<1x1x32xf32> to vector<2x8x32xf32>
    %4 = arith.mulf %1, %3 : vector<2x8x32xf32>
    %cst = arith.constant dense<0.000000e+00> : vector<2x8xf32>
    %5 = vector.multi_reduction <add>, %4, %cst [2] : vector<2x8x32xf32> to vector<2x8xf32>
    %c0_4 = arith.constant 0 : index
    %c0_5 = arith.constant 0 : index
    %6 = vector.load %arg4[%c0_4, %c0_5] : memref<2x8xf32, #tpu.memory_space<vmem>>, vector<2x8xf32>
    tpu.vector_store %arg4[%c0_4, %c0_5], %5 {strides = array<i32>} : memref<2x8xf32, #tpu.memory_space<vmem>>, vector<2x8xf32>,
    %c0_6 = arith.constant 0 : index
    %c0_7 = arith.constant 0 : index
    %7 = vector.load %arg4[%c0_6, %c0_7] : memref<2x8xf32, #tpu.memory_space<vmem>>, vector<2x8xf32>
    %cst_8 = arith.constant dense<0xFF800000> : vector<2xf32>
    %8 = vector.multi_reduction <maximumf>, %7, %cst_8 [1] : vector<2x8xf32> to vector<2xf32>
    %9 = vector.shape_cast %8 : vector<2xf32> to vector<2x1xf32>
    %10 = vector.broadcast %9 : vector<2x1xf32> to vector<2x8xf32>
    %11 = arith.subf %7, %10 : vector<2x8xf32>
    %12 = math.exp %11 : vector<2x8xf32>
    %cst_9 = arith.constant dense<0.000000e+00> : vector<2xf32>
    %13 = vector.multi_reduction <add>, %12, %cst_9 [1] : vector<2x8xf32> to vector<2xf32>
    %14 = vector.shape_cast %13 : vector<2xf32> to vector<2x1xf32>
    %c0_10 = arith.constant 0 : index
    %c0_11 = arith.constant 0 : index
    %15 = vector.load %arg4[%c0_10, %c0_11] : memref<2x8xf32, #tpu.memory_space<vmem>>, vector<2x8xf32>
    tpu.vector_store %arg4[%c0_10, %c0_11], %12 {strides = array<i32>} : memref<2x8xf32, #tpu.memory_space<vmem>>, vector<2x8xf32>,
    %cst_12 = arith.constant 0.000000e+00 : f32
    %16 = vector.broadcast %cst_12 : f32 to vector<2x32xf32>
    %c0_13 = arith.constant 0 : index
    %c0_14 = arith.constant 0 : index
    %17 = vector.load %arg5[%c0_13, %c0_14] : memref<2x32xf32, #tpu.memory_space<vmem>>, vector<2x32xf32>
    tpu.vector_store %arg5[%c0_13, %c0_14], %16 {strides = array<i32>} : memref<2x32xf32, #tpu.memory_space<vmem>>, vector<2x32xf32>,
    %c0_15 = arith.constant 0 : index
    %c0_16 = arith.constant 0 : index
    %c0_17 = arith.constant 0 : index
    %18 = vector.load %arg1[%c0_15, %c0_16, %c0_17] : memref<2x8x32xf32, #tpu.memory_space<vmem>>, vector<2x8x32xf32>
    %c0_18 = arith.constant 0 : index
    %c0_19 = arith.constant 0 : index
    %19 = vector.load %arg4[%c0_18, %c0_19] : memref<2x8xf32, #tpu.memory_space<vmem>>, vector<2x8xf32>
    %c0_20 = arith.constant 0 : index
    %c0_21 = arith.constant 0 : index
    %20 = vector.load %arg5[%c0_20, %c0_21] : memref<2x32xf32, #tpu.memory_space<vmem>>, vector<2x32xf32>
    %21 = vector.shape_cast %19 : vector<2x8xf32> to vector<2x8x1xf32>
    %22 = vector.broadcast %21 : vector<2x8x1xf32> to vector<2x8x32xf32>
    %23 = arith.mulf %22, %18 : vector<2x8x32xf32>
    %cst_22 = arith.constant dense<0.000000e+00> : vector<2x32xf32>
    %24 = vector.multi_reduction <add>, %23, %cst_22 [1] : vector<2x8x32xf32> to vector<2x32xf32>
    %25 = arith.addf %20, %24 : vector<2x32xf32>
    %c0_23 = arith.constant 0 : index
    %c0_24 = arith.constant 0 : index
    %26 = vector.load %arg5[%c0_23, %c0_24] : memref<2x32xf32, #tpu.memory_space<vmem>>, vector<2x32xf32>
    tpu.vector_store %arg5[%c0_23, %c0_24], %25 {strides = array<i32>} : memref<2x32xf32, #tpu.memory_space<vmem>>, vector<2x32xf32>,
    %27 = tpu.reciprocal %14 : vector<2x1xf32> -> vector<2x1xf32>
    %c0_25 = arith.constant 0 : index
    %c0_26 = arith.constant 0 : index
    %28 = vector.load %arg5[%c0_25, %c0_26] : memref<2x32xf32, #tpu.memory_space<vmem>>, vector<2x32xf32>
    %29 = vector.broadcast %27 : vector<2x1xf32> to vector<2x32xf32>
    %30 = arith.mulf %28, %29 : vector<2x32xf32>
    %c0_27 = arith.constant 0 : index
    %c0_28 = arith.constant 0 : index
    %31 = vector.load %arg3[%c0_27, %c0_28] : memref<2x32xf32, #tpu.memory_space<vmem>>, vector<2x32xf32>
    tpu.vector_store %arg3[%c0_27, %c0_28], %30 {strides = array<i32>} : memref<2x32xf32, #tpu.memory_space<vmem>>, vector<2x32xf32>,
    return
  }
  func.func @transform_0(%arg0: i32) -> (i32, i32, i32) {
    %c0_i32 = arith.constant 0 : i32
    %c0_i32_0 = arith.constant 0 : i32
    %c0_i32_1 = arith.constant 0 : i32
    return %arg0, %c0_i32, %c0_i32_0 : i32, i32, i32
  }
  func.func @transform_1(%arg0: i32) -> (i32, i32) {
    %c0_i32 = arith.constant 0 : i32
    %c0_i32_0 = arith.constant 0 : i32
    %c0_i32_1 = arith.constant 0 : i32
    return %c0_i32, %c0_i32_0 : i32, i32
  }
  func.func @transform_2(%arg0: i32) -> (i32, i32) {
    %c0_i32 = arith.constant 0 : i32
    %c0_i32_0 = arith.constant 0 : i32
    return %arg0, %c0_i32 : i32, i32
  }
}

</mosaic_0001>

<llo_original>
// kernel: tpu_custom_call.1
$region0: #{tpu_custom_call.1}
  #allocation0 [shape = 'u32[]', space=smem, size = 0x4, offset = 0x4, fixed_abs, tag = 'smem constant byte address 0x4 - core index']
  #allocation1 [shape = 'u32[144,128]{1,0:T(1,128)}', space=vmem, size = 0x12000, scoped, tag = 'internal scratch']
  #allocation2 [shape = 'f32[2,8]{1,0:T(2,128)}', space=vmem, size = 0x400, scoped, tag = 'scratch operand']
  #allocation3 [shape = 'f32[2,32]{1,0:T(2,128)}', space=vmem, size = 0x400, scoped, tag = 'scratch operand']
  %s0 = inlined_call_operand.hbm [shape: f32[2,8,32], index: 0, kind: input, shape index: {}]
  %s1 = inlined_call_operand.vmem [shape: f32[1,32], index: 1, kind: input, shape index: {}]
  %s2 = inlined_call_operand.hbm [shape: f32[2,32], index: 2, kind: output, shape index: {}]
  %s3 = sld [smem:[#allocation0]]
  $region22: #{tpu_custom_call.1} parent=0
    _
  %s5 = ssub.s32 1, %s3
  %s6 = scalar_select 0, %s5, %s3
  $region1: #{tpu_custom_call.1} parent=0
    #allocation4 [shape = 'u8[8192]{0}', space=vmem, size = 0x2000, scoped, tag = 'input window, operand 0, single buffered']
    #allocation5 [shape = 's32[1]{0}', space=sflag, size = 0x4, scoped, tag = 'scoped memory for tpu_custom_call.1']
    #allocation6 [shape = 's32[1]{0}', space=sflag, size = 0x4, scoped, tag = 'scoped memory for tpu_custom_call.1']
    #allocation7 [shape = 'u8[1024]{0}', space=vmem, size = 0x400, scoped, tag = 'output window, operand 0, single buffered']
    %7 = vsyncpa [#allocation5], 0
    %8 = vsyncpa [#allocation6], 0
    // Predicated region
    $region2: #{tpu_custom_call.1} parent=1 // pred_check
      _
    $region3: #{tpu_custom_call.1} parent=1 // pred_check_branch
      %10 = sbr.rel (0) target = $region5
    $region4: #{tpu_custom_call.1} parent=1 // pred_region
      %s12 = ssub.s32 256, 256
      %13 = vsyncadd [#allocation5], %s12
      %s14 = sshll.u32 [#allocation4], 4
      %s15 = int_to_ptr.vmem [resolvable:$true] %s14
      %20 = dma.hbm_to_vmem [thread:$0]  %s0, 256, %s15, [#allocation5], 128, 128, 8
    $region5: #{tpu_custom_call.1} parent=1 // pred_fallthru
      _
    // Predicated region
    $region6: #{tpu_custom_call.1} parent=1 // pred_check
      _
    $region7: #{tpu_custom_call.1} parent=1 // pred_check_branch
      %22 = sbr.rel (0) target = $region9
    $region8: #{tpu_custom_call.1} parent=1 // pred_region
      _
    $region9: #{tpu_custom_call.1} parent=1 // pred_fallthru
      _
    // Predicated region
    $region10: #{tpu_custom_call.1} parent=1 // pred_check
      _
    $region11: #{tpu_custom_call.1} parent=1 // pred_check_branch
      %24 = sbr.rel (0) target = $region13
    $region12: #{tpu_custom_call.1} parent=1 // pred_region
      %25 = dma.done [#allocation5], 256
    $region13: #{tpu_custom_call.1} parent=1 // pred_fallthru
      _
    %v26 = vld [vmem:[%s1] sm:$0x1]
    %v27 = vld [vmem:[#allocation4] sm:$0xff]
    %v28 = vld [vmem:[#allocation4 + $0x8] sm:$0xff]
    %v30 = vlaneseq
    %v31 = vshrl.u32 %v30, 7
    %v32 = vsub.s32 0, %v31
    %v33 = vrot.slane %v26, %v32
    %v35 = vmul.f32 %v27, %v33
    %v36 = vmul.f32 %v28, %v33
    %vm37 = vcmask 261120
    %v38 = vsel %vm37, %v35, 0.0
    %39 = vadd.xlane.f32.xlu0 %v38
    %v40 = vpop.xlane.xlu0 %39
    %v41 = vsel %vm37, %v36, 0.0
    %42 = vadd.xlane.f32.xlu0 %v41
    %v43 = vpop.xlane.xlu0 %42
    %v46 = vlaneseq
    %v47 = vand.u32 %v46, 127
    %v48 = vlaneseq
    %v49 = vshrl.u32 %v48, 7
    %v50 = vsub.s32 %v47, %v49
    %v51 = vrot.slane %v40, %v50
    %v52 = vlaneseq
    %v53 = vshrl.u32 %v52, 7
    %v54 = vsub.s32 %v47, %v53
    %v55 = vrot.slane %v43, %v54
    %vm56 = vcmask 1041409
    %v57 = vsel %vm56, %v55, %v51
    %vm59 = vcmask 58368
    %60 = vst.msk [vmem:[#allocation2] sm:$0x3] %vm59, %v57
    %v61 = vld [vmem:[#allocation2] sm:$0x3]
    %v62 = vsel %vm59, %v61, -inf
    %63 = vmax.xlane.f32.xlu0 %v62
    %v64 = vpop.xlane.xlu0 %63
    %v65 = vsub.f32 %v61, %v64
    %v66 = vmul.f32 %v65, 1.442695
    %v67 = vpow.pop %v66
    %v68 = vsel %vm59, %v67, 0.0
    %69 = vadd.xlane.f32.xlu0 %v68
    %v70 = vpop.xlane.xlu0 %69
    %71 = vst.msk [vmem:[#allocation2] sm:$0x3] %vm59, %v67
    %vm72 = vcmask 254976
    %73 = vst.msk [vmem:[#allocation3] sm:$0x3] %vm72, 0.0
    %v74 = vld [vmem:[#allocation4] sm:$0xff]
    %v75 = vld [vmem:[#allocation4 + $0x8] sm:$0xff]
    %v76 = vld [vmem:[#allocation2] sm:$0x3]
    %v77 = vld [vmem:[#allocation3] sm:$0x3]
    %v78 = vlaneseq
    %v79 = vshrl.u32 %v78, 7
    %v80 = vsub.s32 0, %v79
    %v81 = vrot.slane %v76, %v80
    %83 = vbcast.lane.b32.xlu0 %v81, 256
    %v84 = vpop.permute.xlu0 %83
    %v85 = vlaneseq
    %v86 = vshrl.u32 %v85, 7
    %v87 = vsub.s32 1, %v86
    %v88 = vrot.slane %v76, %v87
    %90 = vbcast.lane.b32.xlu0 %v88, 256
    %v91 = vpop.permute.xlu0 %90
    %v92 = vmul.f32 %v84, %v74
    %v93 = vmul.f32 %v91, %v75
    %v94 = vsel %vm37, %v92, 0.0
    %v95 = vrot.slane %v94, 4
    %v96 = vadd.f32 %v94, %v95
    %v97 = vrot.slane %v96, 2
    %v98 = vadd.f32 %v96, %v97
    %v99 = vrot.slane %v98, 1
    %v100 = vadd.f32 %v98, %v99
    %v101 = vsel %vm37, %v93, 0.0
    %v102 = vrot.slane %v101, 4
    %v103 = vadd.f32 %v101, %v102
    %v104 = vrot.slane %v103, 2
    %v105 = vadd.f32 %v103, %v104
    %v106 = vrot.slane %v105, 1
    %v107 = vadd.f32 %v105, %v106
    %v110 = vsel %vm56, %v107, %v100
    %v112 = vadd.f32 %v77, %v110
    %113 = vst.msk [vmem:[#allocation3] sm:$0x3] %vm72, %v112
    %v114 = vrcp.pop %v70
    %v115 = vld [vmem:[#allocation3] sm:$0x3]
    %v116 = vmul.f32 %v115, %v114
    %117 = vst.msk [vmem:[#allocation7] sm:$0x3] %vm72, %v116
    // Predicated region
    $region14: #{tpu_custom_call.1} parent=1 // pred_check
      _
    $region15: #{tpu_custom_call.1} parent=1 // pred_check_branch
      %119 = sbr.rel (0) target = $region17
    $region16: #{tpu_custom_call.1} parent=1 // pred_region
      %s121 = ssub.s32 32, 32
      %122 = vsyncadd [#allocation6], %s121
      %s124 = sshll.u32 [#allocation7], 4
      %s125 = int_to_ptr.vmem [resolvable:$true] %s124
      %127 = dma.vmem_to_hbm [thread:$0]  %s125, 32, %s2, [#allocation6]
    $region17: #{tpu_custom_call.1} parent=1 // pred_fallthru
      _
    // Predicated region
    $region18: #{tpu_custom_call.1} parent=1 // pred_check
      _
    $region19: #{tpu_custom_call.1} parent=1 // pred_check_branch
      %129 = sbr.rel (0) target = $region21
    $region20: #{tpu_custom_call.1} parent=1 // pred_region
      %130 = dma.done [#allocation6], 32
    $region21: #{tpu_custom_call.1} parent=1 // pred_fallthru
      _
    %131 = vsyncpa [#allocation5], 1
    %132 = vsyncpa [#allocation6], 1

</llo_original>
